<compile_context>
chip_gen: v7x
topology: tpu7x:2x2x1
jax: 0.10.0
libtpu: 0.0.40
codegen_flags: <defaults>
</compile_context>

<pallas_src>
import functools

import jax
import jax.numpy as jnp
from jax.experimental import pallas as pl
from jax.experimental.pallas import tpu as pltpu

_IN_FEATURES = 128
_OUT_FEATURES = 12

_TB_MAX = 16384            # f32 x tile = 8 MiB; 2x-buffered fits 32 MiB scoped VMEM
_TARGET_GRID_STEPS = 4     # >= 2 so the batch axis shards across v7x's two TCs
_SMALL_BATCH_XLA = 2048    # below this, pallas_call fixed cost dominates -> plain XLA
_VMEM_LIMIT_BYTES = 32 << 20  # raises v5e's 16 MiB default; < v7x 64 MiB physical


def _round_up(v, m):
    return ((v + m - 1) // m) * m


def _fc_kernel(x_ref, w_ref, b_ref, o_ref):
    # x_ref: (TB, 128) f32, w_ref: (128, 12) bf16, b_ref: (1, 12) f32
    # Cast x to bf16 in-kernel (VPU, hidden under the DMA); MXU matmul with
    # f32 accumulation; bias add and output store in f32.
    x_bf16 = x_ref[...].astype(jnp.bfloat16)
    y = jnp.dot(x_bf16, w_ref[...], preferred_element_type=jnp.float32)
    o_ref[...] = y + b_ref[...]


def prepare_params(weight, bias):
    """One-time param prep (hoisted out of the per-call path).

    weight: (12, 128) PyTorch nn.Linear layout -> returns (128, 12) bf16
    bias:   (12,)                              -> returns (1, 12) f32
    """
    w_t = jnp.asarray(weight).T.astype(jnp.bfloat16)             # (128, 12)
    b2d = jnp.asarray(bias).reshape(1, -1).astype(jnp.float32)   # (1, 12)
    return w_t, b2d


@functools.partial(jax.jit, static_argnames=("force_pallas",))
def fc_layer(x_nchw, w_t_bf16, b2d_f32, *, force_pallas=False):
    """Forward pass of FCLayer: Flatten -> Linear(128, 12).

    x_nchw:   (B, C, H, W) with C*H*W == 128 (f32)
    w_t_bf16: (128, 12) bf16 (from prepare_params)
    b2d_f32:  (1, 12) f32   (from prepare_params)
    returns:  (B, 12) float32
    """
    B = x_nchw.shape[0]
    x_flat = x_nchw.reshape(B, -1)  # nn.Flatten (row-major, like torch)
    assert x_flat.shape[1] == _IN_FEATURES, "FCLayer expects 128 flattened features"

    # Small-batch fast path: kernel launch/grid overhead dominates; same math.
    if not force_pallas and B < _SMALL_BATCH_XLA:
        y = jnp.dot(x_flat.astype(jnp.bfloat16), w_t_bf16,
                    preferred_element_type=jnp.float32)
        return y + b2d_f32

    # Batch tile: aim for >= _TARGET_GRID_STEPS grid steps (megacore sharding,
    # DMA/compute overlap), capped at a multi-MiB tile; multiple of 8, or the
    # full array when B is small (block dim == array dim is legal).
    tb = min(_TB_MAX, _round_up(pl.cdiv(B, _TARGET_GRID_STEPS), 8))
    tb = max(tb, 8)
    if tb >= B:
        tb = B
    grid = (pl.cdiv(B, tb),)

    out = pl.pallas_call(
        _fc_kernel,
        out_shape=jax.ShapeDtypeStruct((B, _OUT_FEATURES), jnp.float32),
        grid=grid,
        in_specs=[
            pl.BlockSpec((tb, _IN_FEATURES), lambda i: (i, 0)),             # x: tiled over batch
            pl.BlockSpec((_IN_FEATURES, _OUT_FEATURES), lambda i: (0, 0)),  # W: resident
            pl.BlockSpec((1, _OUT_FEATURES), lambda i: (0, 0)),             # b: resident
        ],
        out_specs=pl.BlockSpec((tb, _OUT_FEATURES), lambda i: (i, 0)),
        compiler_params=pltpu.CompilerParams(
            dimension_semantics=("parallel",),       # shard batch across TCs on v7x
            vmem_limit_bytes=_VMEM_LIMIT_BYTES,      # big tiles on v5e too
        ),
    )(x_flat, w_t_bf16, b2d_f32)
    return out


def init_params(key):
    """Deterministic init mimicking torch.nn.Linear(128, 12) defaults."""
    k_w, k_b = jax.random.split(key)
    bound = 1.0 / jnp.sqrt(float(_IN_FEATURES))
    weight = jax.random.uniform(k_w, (_OUT_FEATURES, _IN_FEATURES), jnp.float32, -bound, bound)
    bias = jax.random.uniform(k_b, (_OUT_FEATURES,), jnp.float32, -bound, bound)
    return weight, bias


if __name__ == "__main__":
    key = jax.random.PRNGKey(0)
    k_x, k_p, k_x2 = jax.random.split(key, 3)

    # (B, C, H, W) = (2, 2, 8, 8)  ->  C*H*W = 128 flattened features
    x = jax.random.normal(k_x, (2, 2, 8, 8), jnp.float32)
    weight, bias = init_params(k_p)
    w_t_bf16, b2d_f32 = prepare_params(weight, bias)  # hoisted one-time prep

    # 1) Exercise the Pallas kernel itself (bypass the small-batch XLA path).
    y = fc_layer(x, w_t_bf16, b2d_f32, force_pallas=True)
    jax.block_until_ready(y)
    y_ref = x.reshape(2, -1) @ weight.T + bias
    assert y.shape == (2, _OUT_FEATURES)
    assert jnp.allclose(y, y_ref, rtol=2e-2, atol=2e-2), "pallas mismatch vs reference"

    # 2) Exercise the multi-step tiled grid path (4 grid steps at B=64).
    x2 = jax.random.normal(k_x2, (64, 2, 8, 8), jnp.float32)
    y2 = fc_layer(x2, w_t_bf16, b2d_f32, force_pallas=True)
    jax.block_until_ready(y2)
    y2_ref = x2.reshape(64, -1) @ weight.T + bias
    assert jnp.allclose(y2, y2_ref, rtol=2e-2, atol=2e-2), "tiled pallas mismatch"

    # 3) Default dispatch (small-batch XLA fast path) must match too.
    y3 = fc_layer(x, w_t_bf16, b2d_f32)
    jax.block_until_ready(y3)
    assert jnp.allclose(y3, y_ref, rtol=2e-2, atol=2e-2), "fast-path mismatch"

    print("KERNEL_OK")
</pallas_src>

<mosaic_0001>
module attributes {stable_mosaic.version = 11 : i64} {
  func.func @_fc_kernel(%arg0: i32, %arg1: memref<2x128xf32, #tpu.memory_space<vmem>>, %arg2: memref<128x12xbf16, #tpu.memory_space<vmem>>, %arg3: memref<1x12xf32, #tpu.memory_space<vmem>>, %arg4: memref<2x12xf32, #tpu.memory_space<vmem>>) attributes {dimension_semantics = [#tpu.dimension_semantics<parallel>], iteration_bounds = array<i64: 1>, scalar_prefetch = 0 : i64, scratch_operands = 0 : i64, tpu.core_type = #tpu.core_type<tc>, window_params = [{transform_indices = @transform_0, window_bounds = array<i64: 2, 128>}, {pipeline_mode = #tpu.pipeline_mode<synchronous>, transform_indices = @transform_1, window_bounds = array<i64: 128, 12>}, {pipeline_mode = #tpu.pipeline_mode<synchronous>, transform_indices = @transform_2, window_bounds = array<i64: 1, 12>}, {transform_indices = @transform_3, window_bounds = array<i64: 2, 12>}]} {
    %c0 = arith.constant 0 : index
    %c0_0 = arith.constant 0 : index
    %0 = vector.load %arg1[%c0, %c0_0] : memref<2x128xf32, #tpu.memory_space<vmem>>, vector<2x128xf32>
    %1 = arith.truncf %0 : vector<2x128xf32> to vector<2x128xbf16>
    %c0_1 = arith.constant 0 : index
    %c0_2 = arith.constant 0 : index
    %2 = vector.load %arg2[%c0_1, %c0_2] : memref<128x12xbf16, #tpu.memory_space<vmem>>, vector<128x12xbf16>
    %cst = arith.constant dense<0.000000e+00> : vector<2x12xf32>
    %3 = tpu.matmul %1, %2, %cst {dimension_numbers = #tpu.dot_dimension_numbers<[1], [0], [0], [1], [0, 0, 1, 1], [], []>} : vector<2x128xbf16>, vector<128x12xbf16>, vector<2x12xf32> -> vector<2x12xf32>
    %c0_3 = arith.constant 0 : index
    %c0_4 = arith.constant 0 : index
    %4 = vector.load %arg3[%c0_3, %c0_4] : memref<1x12xf32, #tpu.memory_space<vmem>>, vector<1x12xf32>
    %5 = vector.broadcast %4 : vector<1x12xf32> to vector<2x12xf32>
    %6 = arith.addf %3, %5 : vector<2x12xf32>
    %c0_5 = arith.constant 0 : index
    %c0_6 = arith.constant 0 : index
    %7 = vector.load %arg4[%c0_5, %c0_6] : memref<2x12xf32, #tpu.memory_space<vmem>>, vector<2x12xf32>
    tpu.vector_store %arg4[%c0_5, %c0_6], %6 {strides = array<i32>} : memref<2x12xf32, #tpu.memory_space<vmem>>, vector<2x12xf32>,
    return
  }
  func.func @transform_0(%arg0: i32) -> (i32, i32) {
    %c0_i32 = arith.constant 0 : i32
    %c0_i32_0 = arith.constant 0 : i32
    return %arg0, %c0_i32 : i32, i32
  }
  func.func @transform_1(%arg0: i32) -> (i32, i32) {
    %c0_i32 = arith.constant 0 : i32
    %c0_i32_0 = arith.constant 0 : i32
    %c0_i32_1 = arith.constant 0 : i32
    return %c0_i32, %c0_i32_0 : i32, i32
  }
  func.func @transform_2(%arg0: i32) -> (i32, i32) {
    %c0_i32 = arith.constant 0 : i32
    %c0_i32_0 = arith.constant 0 : i32
    %c0_i32_1 = arith.constant 0 : i32
    return %c0_i32, %c0_i32_0 : i32, i32
  }
  func.func @transform_3(%arg0: i32) -> (i32, i32) {
    %c0_i32 = arith.constant 0 : i32
    %c0_i32_0 = arith.constant 0 : i32
    return %arg0, %c0_i32 : i32, i32
  }
}

</mosaic_0001>

<llo_original>
// kernel: fc_layer.1
$region0: #{fc_layer.1}
  #allocation0 [shape = 'u32[]', space=smem, size = 0x4, offset = 0x4, fixed_abs, tag = 'smem constant byte address 0x4 - core index']
  #allocation1 [shape = 'u32[144,128]{1,0:T(1,128)}', space=vmem, size = 0x12000, scoped, tag = 'internal scratch']
  %s0 = inlined_call_operand.vmem [shape: f32[2,128], index: 0, kind: input, shape index: {}]
  %s1 = inlined_call_operand.vmem [shape: bf16[128,12], index: 1, kind: input, shape index: {}]
  %s2 = inlined_call_operand.vmem [shape: f32[1,12], index: 2, kind: input, shape index: {}]
  %s3 = inlined_call_operand.hbm [shape: f32[2,12], index: 3, kind: output, shape index: {}]
  %s4 = sld [smem:[#allocation0]]
  $region22: #{fc_layer.1} parent=0
    _
  %s6 = ssub.s32 1, %s4
  %s7 = scalar_select 0, %s6, %s4
  $region1: #{fc_layer.1} parent=0
    #allocation2 [shape = 'u8[1024]{0}', space=vmem, size = 0x400, scoped, tag = 'output window, operand 0, single buffered']
    #allocation3 [shape = 's32[1]{0}', space=sflag, size = 0x4, scoped, tag = 'scoped memory for fc_layer.1']
    %8 = vsyncpa [#allocation3], 0
    // Predicated region
    $region2: #{fc_layer.1} parent=1 // pred_check
      _
    $region3: #{fc_layer.1} parent=1 // pred_check_branch
      %10 = sbr.rel (0) target = $region5
    $region4: #{fc_layer.1} parent=1 // pred_region
      _
    $region5: #{fc_layer.1} parent=1 // pred_fallthru
      _
    // Predicated region
    $region6: #{fc_layer.1} parent=1 // pred_check
      _
    $region7: #{fc_layer.1} parent=1 // pred_check_branch
      %12 = sbr.rel (0) target = $region9
    $region8: #{fc_layer.1} parent=1 // pred_region
      _
    $region9: #{fc_layer.1} parent=1 // pred_fallthru
      _
    // Predicated region
    $region10: #{fc_layer.1} parent=1 // pred_check
      _
    $region11: #{fc_layer.1} parent=1 // pred_check_branch
      %14 = sbr.rel (0) target = $region13
    $region12: #{fc_layer.1} parent=1 // pred_region
      _
    $region13: #{fc_layer.1} parent=1 // pred_fallthru
      _
    %v16 = vld [vmem:[%s0] sm:$0x3]
    %v17 = vpack.c.bf16 %v16, %v16
    %v18 = vld [vmem:[%s1] sm:$0xf]
    %v19 = vld [vmem:[%s1 + $0x4] sm:$0xf]
    %v20 = vld [vmem:[%s1 + $0x8] sm:$0xf]
    %v21 = vld [vmem:[%s1 + $0xc] sm:$0xf]
    %v22 = vld [vmem:[%s1 + $0x10] sm:$0xf]
    %v23 = vld [vmem:[%s1 + $0x14] sm:$0xf]
    %v24 = vld [vmem:[%s1 + $0x18] sm:$0xf]
    %v25 = vld [vmem:[%s1 + $0x1c] sm:$0xf]
    %v26 = vld [vmem:[%s1 + $0x20] sm:$0xf]
    %v27 = vld [vmem:[%s1 + $0x24] sm:$0xf]
    %v28 = vld [vmem:[%s1 + $0x28] sm:$0xf]
    %v29 = vld [vmem:[%s1 + $0x2c] sm:$0xf]
    %v30 = vld [vmem:[%s1 + $0x30] sm:$0xf]
    %v31 = vld [vmem:[%s1 + $0x34] sm:$0xf]
    %v32 = vld [vmem:[%s1 + $0x38] sm:$0xf]
    %v33 = vld [vmem:[%s1 + $0x3c] sm:$0xf]
    %v34 = vld [vmem:[%s2] sm:$0x1]
    %v36 = vlaneseq
    %v37 = vshrl.u32 %v36, 7
    %v38 = vsub.s32 0, %v37
    %v39 = vrot.slane %v34, %v38
    %v57 = vunpack.c.l.b16 %v18
    %v58 = vunpack.c.l.b16 %v19
    %v59 = vunpack.c.l.b16 %v20
    %v60 = vunpack.c.l.b16 %v21
    %v61 = vunpack.c.l.b16 %v22
    %v62 = vunpack.c.l.b16 %v23
    %v63 = vunpack.c.l.b16 %v24
    %v64 = vunpack.c.l.b16 %v25
    %v65 = vunpack.c.l.b16 %v26
    %v66 = vunpack.c.l.b16 %v27
    %v67 = vunpack.c.l.b16 %v28
    %v68 = vunpack.c.l.b16 %v29
    %v69 = vunpack.c.l.b16 %v30
    %v70 = vunpack.c.l.b16 %v31
    %v71 = vunpack.c.l.b16 %v32
    %v72 = vunpack.c.l.b16 %v33
    %v73 = vpack.c.b16 %v58, %v57
    %v74 = vpack.c.b16 %v60, %v59
    %v75 = vpack.c.b16 %v62, %v61
    %v76 = vpack.c.b16 %v64, %v63
    %v77 = vpack.c.b16 %v66, %v65
    %v78 = vpack.c.b16 %v68, %v67
    %v79 = vpack.c.b16 %v70, %v69
    %v80 = vpack.c.b16 %v72, %v71
    %89 = vmatprep.subr.bf16.mxu0 0
    %90 = vmatpush1.bf16.msra.mxu0 %v73
    %91 = vmatprep.subr.bf16.mxu0 0
    %92 = vmatpush1.bf16.msra.mxu0 %v74
    %93 = vmatprep.subr.bf16.mxu0 0
    %94 = vmatpush1.bf16.msra.mxu0 %v75
    %95 = vmatprep.subr.bf16.mxu0 0
    %96 = vmatpush1.bf16.msra.mxu0 %v76
    %97 = vmatprep.subr.bf16.mxu0 0
    %98 = vmatpush1.bf16.msra.mxu0 %v77
    %99 = vmatprep.subr.bf16.mxu0 0
    %100 = vmatpush1.bf16.msra.mxu0 %v78
    %101 = vmatprep.subr.bf16.mxu0 0
    %102 = vmatpush1.bf16.msra.mxu0 %v79
    %103 = vmatprep.subr.bf16.mxu0 0
    %104 = vmatpush1.bf16.msra.mxu0 %v80
    %105 = vmatprep.subr.bf16.mxu0 0
    %106 = vmatpush1.bf16.msra.mxu0 0
    %107 = vmatprep.subr.bf16.mxu0 0
    %108 = vmatpush1.bf16.msra.mxu0 0
    %109 = vmatprep.subr.bf16.mxu0 0
    %110 = vmatpush1.bf16.msra.mxu0 0
    %111 = vmatprep.subr.bf16.mxu0 0
    %112 = vmatpush1.bf16.msra.mxu0 0
    %113 = vmatprep.subr.bf16.mxu0 0
    %114 = vmatpush1.bf16.msra.mxu0 0
    %115 = vmatprep.subr.bf16.mxu0 0
    %116 = vmatpush1.bf16.msra.mxu0 0
    %117 = vmatprep.subr.bf16.mxu0 0
    %118 = vmatpush1.bf16.msra.mxu0 0
    %119 = vmatprep.subr.bf16.mxu0 0
    %120 = vmatpush1.bf16.msra.mxu0 0
    %121 = vmatprep.mubr.bf16.mxu0 0
    %122 = vmatmul.mubr.bf16.gmra.mrb[0].mxu0 %v17
    %v123 = vpop.f32.mrb[0].mxu0
    %v124 = vadd.f32 %v39, %v123
    %v125 = vpop.f32.mrb[0].mxu0
    %v126 = vpop.f32.mrb[0].mxu0
    %v127 = vpop.f32.mrb[0].mxu0
    %128 = vdwg.mxu0
    %vm129 = vcmask 91136
    %130 = vst.msk [vmem:[#allocation2] sm:$0x3] %vm129, %v124
    // Predicated region
    $region14: #{fc_layer.1} parent=1 // pred_check
      _
    $region15: #{fc_layer.1} parent=1 // pred_check_branch
      %132 = sbr.rel (0) target = $region17
    $region16: #{fc_layer.1} parent=1 // pred_region
      %s134 = ssub.s32 32, 32
      %135 = vsyncadd [#allocation3], %s134
      %s137 = sshll.u32 [#allocation2], 4
      %s138 = int_to_ptr.vmem [resolvable:$true] %s137
      %140 = dma.vmem_to_hbm [thread:$0]  %s138, 32, %s3, [#allocation3]
    $region17: #{fc_layer.1} parent=1 // pred_fallthru
      _
    // Predicated region
    $region18: #{fc_layer.1} parent=1 // pred_check
      _
    $region19: #{fc_layer.1} parent=1 // pred_check_branch
      %142 = sbr.rel (0) target = $region21
    $region20: #{fc_layer.1} parent=1 // pred_region
      %143 = dma.done [#allocation3], 32
    $region21: #{fc_layer.1} parent=1 // pred_fallthru
      _
    %144 = vsyncpa [#allocation3], 1

</llo_original>
